<compile_context>
chip_gen: v6e
topology: v6e:2x2x1
jax: 0.10.0
libtpu: 0.0.40
codegen_flags: <defaults>
</compile_context>

<pallas_src>
import jax
import jax.numpy as jnp
from jax.experimental import pallas as pl
from jax.experimental.pallas import tpu as pltpu


def _round_up(a, b):
    return (a + b - 1) // b * b


def _global_max_pool1d_kernel(x_ref, o_ref):
    # x_ref: (row_block, l_block) tile; o_ref: (1, row_block) lane-dense tile,
    # resident across the L-chunk (reduction) grid axis.
    part = jnp.max(x_ref[...], axis=-1)[None, :]  # (1, row_block)

    @pl.when(pl.program_id(1) == 0)
    def _init():
        o_ref[...] = part

    @pl.when(pl.program_id(1) != 0)
    def _accumulate():
        o_ref[...] = jnp.maximum(o_ref[...], part)


# Per-step input tile budget: 4 MiB (x2 for double-buffering = 8 MiB), safe on
# v5e (16 MiB default scoped VMEM), v6e (32 MiB) and v7x (64 MiB physical).
_MAX_TILE_BYTES = 4 * 1024 * 1024
# Below this element count, a fused XLA reduce beats the pallas_call overhead.
_FALLBACK_ELEMS = 16384


def global_max_pool1d(x, *, use_pallas=None, max_tile_bytes=_MAX_TILE_BYTES):
    """Equivalent of GlobalMaxPool1d.forward: (N, C, L) -> (N, C, 1)."""
    n, c, l = x.shape

    if use_pallas is None:
        use_pallas = x.size >= _FALLBACK_ELEMS
    if not use_pallas:
        # Tiny inputs: plain-JAX reduce is strictly faster than kernel overhead.
        return jnp.max(x, axis=2, keepdims=True)

    rows = n * c
    itemsize = jnp.dtype(x.dtype).itemsize
    sublane = max(8, 32 // itemsize)  # 8 for f32, 16 for bf16, 32 for int8

    # Row-chunk size: multiple of the sublane packing, capped at 512 so tiles
    # stay comfortably within VMEM and the "parallel" grid axis stays large.
    row_block = _round_up(rows, sublane) if rows <= 512 else 512
    rows_pad = _round_up(rows, row_block)

    # L-chunking only when a full-L tile would blow the per-step budget.
    if row_block * l * itemsize <= max_tile_bytes:
        l_block, l_pad = l, l
    else:
        l_block = max(128, (max_tile_bytes // (row_block * itemsize)) // 128 * 128)
        l_pad = _round_up(l, l_block)

    x2 = x.reshape(rows, l)
    if rows_pad != rows or l_pad != l:
        if jnp.issubdtype(x.dtype, jnp.floating):
            fill = -jnp.inf
        elif jnp.issubdtype(x.dtype, jnp.integer):
            fill = int(jnp.iinfo(x.dtype).min)
        else:
            fill = 0
        # Padding filled with the lowest value so it never wins the max.
        x2 = jnp.pad(
            x2, ((0, rows_pad - rows), (0, l_pad - l)), constant_values=fill
        )

    grid = (rows_pad // row_block, l_pad // l_block)

    out = pl.pallas_call(
        _global_max_pool1d_kernel,
        out_shape=jax.ShapeDtypeStruct((1, rows_pad), x.dtype),
        grid_spec=pltpu.PrefetchScalarGridSpec(
            num_scalar_prefetch=0,
            grid=grid,
            in_specs=[pl.BlockSpec((row_block, l_block), lambda i, k: (i, k))],
            # Same output block for every k -> resident accumulator; lane-dense.
            out_specs=pl.BlockSpec((1, row_block), lambda i, k: (0, i)),
        ),
        compiler_params=pltpu.CompilerParams(
            dimension_semantics=("parallel", "arbitrary"),
        ),
    )(x2)

    return out[0, :rows].reshape(n, c, 1)


if __name__ == "__main__":
    key = jax.random.PRNGKey(0)
    k0, k1, k2 = jax.random.split(key, 3)

    # Small shape consistent with a TextCNN conv output: batch=2, channels=4, length=16.
    N, C, L = 2, 4, 16
    x = jax.random.normal(k0, (N, C, L), dtype=jnp.float32)
    out = jax.block_until_ready(global_max_pool1d(x, use_pallas=True))
    ref = jnp.max(x, axis=2, keepdims=True)
    assert out.shape == (N, C, 1), out.shape
    assert jnp.allclose(out, ref), "mismatch vs reference (basic path)"

    # Exercise the L-chunked accumulator path + -inf padding of L.
    xb = jax.random.normal(k1, (2, 24, 400), dtype=jnp.float32)
    outb = jax.block_until_ready(
        global_max_pool1d(xb, use_pallas=True, max_tile_bytes=32 * 1024)
    )
    assert jnp.allclose(outb, jnp.max(xb, axis=2, keepdims=True)), "mismatch (L-chunk path)"

    # Exercise multi-row-block path with row padding (rows = 640 > 512).
    xc = jax.random.normal(k2, (4, 160, 32), dtype=jnp.float32)
    outc = jax.block_until_ready(global_max_pool1d(xc, use_pallas=True))
    assert jnp.allclose(outc, jnp.max(xc, axis=2, keepdims=True)), "mismatch (row-block path)"

    # Auto path: tiny input falls back to plain-JAX reduce.
    assert jnp.allclose(global_max_pool1d(x), ref), "mismatch (fallback path)"

    print("KERNEL_OK")
</pallas_src>

<mosaic_0001>
module attributes {stable_mosaic.version = 11 : i64} {
  func.func @_global_max_pool1d_kernel(%arg0: i32, %arg1: i32, %arg2: memref<8x16xf32, #tpu.memory_space<vmem>>, %arg3: memref<1x8xf32, #tpu.memory_space<vmem>>) attributes {dimension_semantics = [#tpu.dimension_semantics<parallel>, #tpu.dimension_semantics<arbitrary>], iteration_bounds = array<i64: 1, 1>, scalar_prefetch = 0 : i64, scratch_operands = 0 : i64, tpu.core_type = #tpu.core_type<tc>, window_params = [{transform_indices = @transform_0, window_bounds = array<i64: 8, 16>}, {transform_indices = @transform_1, window_bounds = array<i64: 1, 8>}]} {
    %c0 = arith.constant 0 : index
    %c0_0 = arith.constant 0 : index
    %0 = vector.load %arg2[%c0, %c0_0] : memref<8x16xf32, #tpu.memory_space<vmem>>, vector<8x16xf32>
    %cst = arith.constant dense<0xFF800000> : vector<8xf32>
    %1 = vector.multi_reduction <maximumf>, %0, %cst [1] : vector<8x16xf32> to vector<8xf32>
    %2 = vector.shape_cast %1 : vector<8xf32> to vector<1x8xf32>
    %c0_i32 = arith.constant 0 : i32
    %3 = arith.cmpi eq, %arg1, %c0_i32 : i32
    %4 = arith.extui %3 : i1 to i32
    %c0_i32_1 = arith.constant 0 : i32
    %5 = arith.cmpi ne, %4, %c0_i32_1 : i32
    scf.if %5 {
      %c0_4 = arith.constant 0 : index
      %c0_5 = arith.constant 0 : index
      %9 = vector.load %arg3[%c0_4, %c0_5] : memref<1x8xf32, #tpu.memory_space<vmem>>, vector<1x8xf32>
      tpu.vector_store %arg3[%c0_4, %c0_5], %2 {strides = array<i32>} : memref<1x8xf32, #tpu.memory_space<vmem>>, vector<1x8xf32>,
    } else {
    }
    %c0_i32_2 = arith.constant 0 : i32
    %6 = arith.cmpi ne, %arg1, %c0_i32_2 : i32
    %7 = arith.extui %6 : i1 to i32
    %c0_i32_3 = arith.constant 0 : i32
    %8 = arith.cmpi ne, %7, %c0_i32_3 : i32
    scf.if %8 {
      %c0_4 = arith.constant 0 : index
      %c0_5 = arith.constant 0 : index
      %9 = vector.load %arg3[%c0_4, %c0_5] : memref<1x8xf32, #tpu.memory_space<vmem>>, vector<1x8xf32>
      %10 = arith.maximumf %9, %2 : vector<1x8xf32>
      %c0_6 = arith.constant 0 : index
      %c0_7 = arith.constant 0 : index
      %11 = vector.load %arg3[%c0_6, %c0_7] : memref<1x8xf32, #tpu.memory_space<vmem>>, vector<1x8xf32>
      tpu.vector_store %arg3[%c0_6, %c0_7], %10 {strides = array<i32>} : memref<1x8xf32, #tpu.memory_space<vmem>>, vector<1x8xf32>,
    } else {
    }
    return
  }
  func.func @transform_0(%arg0: i32, %arg1: i32) -> (i32, i32) {
    %c0_i32 = arith.constant 0 : i32
    return %arg0, %arg1 : i32, i32
  }
  func.func @transform_1(%arg0: i32, %arg1: i32) -> (i32, i32) {
    %c0_i32 = arith.constant 0 : i32
    %c0_i32_0 = arith.constant 0 : i32
    return %c0_i32, %arg0 : i32, i32
  }
}

</mosaic_0001>

<llo_original>
// kernel: tpu_custom_call.1
$region0: #{tpu_custom_call.1}
  #allocation0 [shape = 'u32[]', space=smem, size = 0x4, offset = 0x4, fixed_abs, tag = 'smem constant byte address 0x4 - core index']
  #allocation1 [shape = 'u32[144,128]{1,0:T(1,128)}', space=vmem, size = 0x12000, scoped, tag = 'internal scratch']
  %s0 = inlined_call_operand.hbm [shape: f32[8,16], index: 0, kind: input, shape index: {}]
  %s1 = inlined_call_operand.hbm [shape: f32[1,8], index: 1, kind: output, shape index: {}]
  %s2 = sld [smem:[#allocation0]]
  $region26: #{tpu_custom_call.1} parent=0
    _
  %s4 = ssub.s32 1, %s2
  %s5 = scalar_select 0, %s4, %s2
  $region1: #{tpu_custom_call.1} parent=0
    #allocation2 [shape = 'u8[4096]{0}', space=vmem, size = 0x1000, scoped, tag = 'input window, operand 0, single buffered']
    #allocation3 [shape = 's32[1]{0}', space=sflag, size = 0x4, scoped, tag = 'scoped memory for tpu_custom_call.1']
    #allocation4 [shape = 's32[1]{0}', space=sflag, size = 0x4, scoped, tag = 'scoped memory for tpu_custom_call.1']
    #allocation5 [shape = 'u8[512]{0}', space=vmem, size = 0x400, scoped, tag = 'output window, operand 0, single buffered']
    %6 = vsyncpa [#allocation3], 0
    %7 = vsyncpa [#allocation4], 0
    // Predicated region
    $region2: #{tpu_custom_call.1} parent=1 // pred_check
      _
    $region3: #{tpu_custom_call.1} parent=1 // pred_check_branch
      %9 = sbr.rel (0) target = $region5
    $region4: #{tpu_custom_call.1} parent=1 // pred_region
      %s11 = ssub.s32 128, 128
      %12 = vsyncadd [#allocation3], %s11
      %s14 = sshll.u32 [#allocation2], 4
      %s15 = int_to_ptr.vmem [resolvable:$true] %s14
      %17 = dma.hbm_to_vmem [thread:$0]  %s0, 128, %s15, [#allocation3]
    $region5: #{tpu_custom_call.1} parent=1 // pred_fallthru
      _
    // Predicated region
    $region6: #{tpu_custom_call.1} parent=1 // pred_check
      _
    $region7: #{tpu_custom_call.1} parent=1 // pred_check_branch
      %19 = sbr.rel (0) target = $region9
    $region8: #{tpu_custom_call.1} parent=1 // pred_region
      %20 = dma.done [#allocation3], 128
    $region9: #{tpu_custom_call.1} parent=1 // pred_fallthru
      _
    %v21 = vld [vmem:[#allocation2] sm:$0xff]
    %vm22 = vcmask 130048
    %v23 = vsel %vm22, %v21, -inf
    %24 = vmax.xlane.f32.xlu0 %v23
    %v25 = vpop.xlane.xlu0 %24
    %p26 = scmp.eq.s32.totalorder 0, 0
    // Predicated region
    $region10: #{tpu_custom_call.1} parent=1 // pred_check
      %p27 = pneg %p26
    $region11: #{tpu_custom_call.1} parent=1 // pred_check_branch
      %29 = sbr.rel (%p27) target = $region13
    $region12: #{tpu_custom_call.1} parent=1 // pred_region
      %v31 = vlaneseq
      %v32 = vand.u32 %v31, 127
      %v33 = vlaneseq
      %v34 = vshrl.u32 %v33, 7
      %v35 = vsub.s32 %v32, %v34
      %v36 = vrot.slane %v25, %v35
      %vm38 = vcmask 57344
      %39 = vst.msk [vmem:[#allocation5] sm:$0x1] %vm38, %v36
    $region13: #{tpu_custom_call.1} parent=1 // pred_fallthru
      _
    %p40 = scmp.ne.s32.totalorder 0, 0
    // Predicated region
    $region14: #{tpu_custom_call.1} parent=1 // pred_check
      %p41 = pneg %p40
    $region15: #{tpu_custom_call.1} parent=1 // pred_check_branch
      %43 = sbr.rel (%p41) target = $region17
    $region16: #{tpu_custom_call.1} parent=1 // pred_region
      %v44 = vld [vmem:[#allocation5] sm:$0x1]
      %v46 = vlaneseq
      %v47 = vshrl.u32 %v46, 7
      %v48 = vsub.s32 0, %v47
      %v49 = vrot.slane %v25, %v48
      %v50 = vlaneseq
      %v51 = vshrl.u32 %v50, 7
      %v52 = vsub.s32 1, %v51
      %v53 = vrot.slane %v25, %v52
      %v54 = vlaneseq
      %v55 = vshrl.u32 %v54, 7
      %v56 = vsub.s32 2, %v55
      %v57 = vrot.slane %v25, %v56
      %v58 = vlaneseq
      %v59 = vshrl.u32 %v58, 7
      %v60 = vsub.s32 3, %v59
      %v61 = vrot.slane %v25, %v60
      %v62 = vlaneseq
      %v63 = vshrl.u32 %v62, 7
      %v64 = vsub.s32 4, %v63
      %v65 = vrot.slane %v25, %v64
      %v66 = vlaneseq
      %v67 = vshrl.u32 %v66, 7
      %v68 = vsub.s32 5, %v67
      %v69 = vrot.slane %v25, %v68
      %v70 = vlaneseq
      %v71 = vshrl.u32 %v70, 7
      %v72 = vsub.s32 6, %v71
      %v73 = vrot.slane %v25, %v72
      %v74 = vlaneseq
      %v75 = vshrl.u32 %v74, 7
      %v76 = vsub.s32 7, %v75
      %v77 = vrot.slane %v25, %v76
      %v78 = vcombine.low %v49, %v53
      %v79 = vcombine.low %v57, %v61
      %v80 = vcombine.low %v65, %v69
      %v81 = vcombine.low %v73, %v77
      %v83 = vunpack.c.l.s4 1966171168
      %v84 = vunpack.c.0.s8 %v83
      %v85 = vlaneseq
      %v86 = vshrl.u32 %v85, 7
      %v87 = vsub.s32 %v84, %v86
      %v88 = vrot.slane %v78, %v87
      %v90 = vunpack.c.l.s4 1966171168
      %v91 = vunpack.c.0.s8 %v90
      %v92 = vlaneseq
      %v93 = vshrl.u32 %v92, 7
      %v94 = vsub.s32 %v91, %v93
      %v95 = vrot.slane %v79, %v94
      %v97 = vunpack.c.l.s4 1966171168
      %v98 = vunpack.c.0.s8 %v97
      %v99 = vlaneseq
      %v100 = vshrl.u32 %v99, 7
      %v101 = vsub.s32 %v98, %v100
      %v102 = vrot.slane %v80, %v101
      %v104 = vunpack.c.l.s4 1966171168
      %v105 = vunpack.c.0.s8 %v104
      %v106 = vlaneseq
      %v107 = vshrl.u32 %v106, 7
      %v108 = vsub.s32 %v105, %v107
      %v109 = vrot.slane %v81, %v108
      %v110 = vcombine.low %v88, %v95
      %v111 = vcombine.low %v102, %v109
      %v113 = vunpack.c.l.s4 1966171168
      %v114 = vunpack.c.0.s8 %v113
      %v115 = vlaneseq
      %v116 = vshrl.u32 %v115, 7
      %v117 = vsub.s32 %v114, %v116
      %v118 = vrot.slane %v110, %v117
      %v120 = vunpack.c.l.s4 1966171168
      %v121 = vunpack.c.0.s8 %v120
      %v122 = vlaneseq
      %v123 = vshrl.u32 %v122, 7
      %v124 = vsub.s32 %v121, %v123
      %v125 = vrot.slane %v111, %v124
      %v126 = vcombine.low %v118, %v125
      %127 = vset.pattern.permute.xlu0 0
      %128 = vperm.xlu0 %127, %v126
      %v129 = vpop.permute.xlu0 %128
      %v130 = vlaneseq
      %v131 = vand.u32 %v130, 127
      %v132 = vlaneseq
      %v133 = vshrl.u32 %v132, 7
      %v134 = vsub.s32 %v131, %v133
      %v135 = vrot.slane %v129, %v134
      %v137 = vunpack.c.l.s4 1966171168
      %v138 = vunpack.c.0.s8 %v137
      %v139 = vlaneseq
      %v140 = vshrl.u32 %v139, 7
      %v141 = vsub.s32 %v138, %v140
      %v142 = vrot.slane %v135, %v141
      %v144 = vunpack.c.l.s4 1966171168
      %v145 = vunpack.c.0.s8 %v144
      %v146 = vlaneseq
      %v147 = vshrl.u32 %v146, 7
      %v148 = vsub.s32 %v145, %v147
      %v149 = vrot.slane %v142, %v148
      %v151 = vmax.f32 %v44, %v149
      %vm152 = vcmask 57344
      %153 = vst.msk [vmem:[#allocation5] sm:$0x1] %vm152, %v151
    $region17: #{tpu_custom_call.1} parent=1 // pred_fallthru
      _
    // Predicated region
    $region18: #{tpu_custom_call.1} parent=1 // pred_check
      _
    $region19: #{tpu_custom_call.1} parent=1 // pred_check_branch
      %155 = sbr.rel (0) target = $region21
    $region20: #{tpu_custom_call.1} parent=1 // pred_region
      %s157 = ssub.s32 16, 16
      %158 = vsyncadd [#allocation4], %s157
      %s160 = sshll.u32 [#allocation5], 4
      %s161 = int_to_ptr.vmem [resolvable:$true] %s160
      %163 = dma.vmem_to_hbm [thread:$0]  %s161, 16, %s1, [#allocation4]
    $region21: #{tpu_custom_call.1} parent=1 // pred_fallthru
      _
    // Predicated region
    $region22: #{tpu_custom_call.1} parent=1 // pred_check
      _
    $region23: #{tpu_custom_call.1} parent=1 // pred_check_branch
      %165 = sbr.rel (0) target = $region25
    $region24: #{tpu_custom_call.1} parent=1 // pred_region
      %166 = dma.done [#allocation4], 16
    $region25: #{tpu_custom_call.1} parent=1 // pred_fallthru
      _
    %167 = vsyncpa [#allocation3], 1
    %168 = vsyncpa [#allocation4], 1

</llo_original>
